<compile_context>
chip_gen: v6e
topology: v6e:2x2x1
jax: 0.10.0
libtpu: 0.0.40
codegen_flags: <defaults>
</compile_context>

<pallas_src>
import functools
import math

import jax
import jax.numpy as jnp
from jax import lax
from jax.experimental import pallas as pl
from jax.experimental.pallas import tpu as pltpu

_VMEM_LIMIT = 48 * 1024 * 1024  # safe on v7x (64 MiB phys), generous for v5e/v6e


def _pick_tile(dim, candidates):
    """Largest candidate tile that divides dim exactly; else the full dim."""
    for t in candidates:
        if dim >= t and dim % t == 0:
            return t
    return dim


# ---------------------------------------------------------------------------
# Tiled, pipelined matmul kernel:  y = x @ W  (f32 VMEM accumulator)
# Reused by both the plain linear and the stacked (3, K, H) QKV projection.
# ---------------------------------------------------------------------------
def _matmul_kernel(x_ref, w_ref, o_ref, acc_ref, *, compute_dtype):
    @pl.when(pl.program_id(2) == 0)
    def _init():
        acc_ref[...] = jnp.zeros_like(acc_ref)

    acc_ref[...] += jnp.dot(
        x_ref[...].astype(compute_dtype),
        w_ref[...].astype(compute_dtype),
        preferred_element_type=jnp.float32,
    )

    @pl.when(pl.program_id(2) == pl.num_programs(2) - 1)
    def _done():
        o_ref[...] = acc_ref[...].astype(o_ref.dtype)


def linear(x, w, *, compute_dtype=None, out_dtype=None):
    """x: (M, K), w: (K, N) -> (M, N). Operands cast to compute_dtype in-kernel."""
    M, K = x.shape
    K2, N = w.shape
    assert K == K2
    out_dtype = x.dtype if out_dtype is None else out_dtype
    compute_dtype = x.dtype if compute_dtype is None else compute_dtype

    # bf16 packs 16 rows per sublane group -> prefer 16-multiples for tm.
    tm_cands = (512, 256, 128, 64, 32, 16) if compute_dtype == jnp.bfloat16 \
        else (512, 256, 128, 64, 32, 16, 8)
    tm = _pick_tile(M, tm_cands)
    tn = _pick_tile(N, (512, 256, 128))
    tk = _pick_tile(K, (512, 256, 128))
    grid = (M // tm, N // tn, K // tk)

    return pl.pallas_call(
        functools.partial(_matmul_kernel, compute_dtype=compute_dtype),
        out_shape=jax.ShapeDtypeStruct((M, N), out_dtype),
        grid_spec=pltpu.PrefetchScalarGridSpec(
            num_scalar_prefetch=0,
            grid=grid,
            in_specs=[
                pl.BlockSpec((tm, tk), lambda i, j, k: (i, k)),
                pl.BlockSpec((tk, tn), lambda i, j, k: (k, j)),
            ],
            out_specs=pl.BlockSpec((tm, tn), lambda i, j, k: (i, j)),
            scratch_shapes=[pltpu.VMEM((tm, tn), jnp.float32)],
        ),
        compiler_params=pltpu.CompilerParams(
            dimension_semantics=("parallel", "parallel", "arbitrary"),
            vmem_limit_bytes=_VMEM_LIMIT,
        ),
    )(x, w)


def qkv_projection(x, w_stacked, *, compute_dtype=None, out_dtype=None):
    """Fused QKV projection for self-attention.

    x: (M, K), w_stacked: (3, K, H)  ->  (3, M, H)
    (q = out[0], k = out[1], v = out[2]); one matmul launch, one read of x.
    """
    M, K = x.shape
    three, K2, H = w_stacked.shape
    assert three == 3 and K == K2
    out_dtype = x.dtype if out_dtype is None else out_dtype
    compute_dtype = x.dtype if compute_dtype is None else compute_dtype

    tm_cands = (512, 256, 128, 64, 32, 16) if compute_dtype == jnp.bfloat16 \
        else (512, 256, 128, 64, 32, 16, 8)
    tm = _pick_tile(M, tm_cands)
    tk = _pick_tile(K, (512, 256, 128))
    grid = (M // tm, 3, K // tk)  # reduction axis last

    return pl.pallas_call(
        functools.partial(_matmul_kernel, compute_dtype=compute_dtype),
        out_shape=jax.ShapeDtypeStruct((3, M, H), out_dtype),
        grid_spec=pltpu.PrefetchScalarGridSpec(
            num_scalar_prefetch=0,
            grid=grid,
            in_specs=[
                pl.BlockSpec((tm, tk), lambda i, j, k: (i, k)),
                pl.BlockSpec((None, tk, H), lambda i, j, k: (j, k, 0)),
            ],
            out_specs=pl.BlockSpec((None, tm, H), lambda i, j, k: (j, i, 0)),
            scratch_shapes=[pltpu.VMEM((tm, H), jnp.float32)],
        ),
        compiler_params=pltpu.CompilerParams(
            dimension_semantics=("parallel", "parallel", "arbitrary"),
            vmem_limit_bytes=_VMEM_LIMIT,
        ),
    )(x, w_stacked)


# ---------------------------------------------------------------------------
# Attention kernel: one (batch, q-tile) grid point, heads chunked along H.
# q_ref: (tq, H)  k_ref/v_ref: (Tk, H)  wo_ref: (H, Dq)  o_ref: (tq, Dq)
# slab_ref: (tq, H) f32 VMEM scratch (per-head outputs; bounds vreg pressure).
# ---------------------------------------------------------------------------
def _mha_attn_kernel(vl_ref, q_ref, k_ref, v_ref, wo_ref, o_ref, slab_ref, *,
                     num_head, dh, scale, mxu_dtype, recip_approx):
    vlen = vl_ref[pl.program_id(0)]      # per-batch valid key length (SMEM)
    tq = q_ref.shape[0]
    tk = k_ref.shape[0]

    # Mask hoisted out of the per-head loop (JAX does not CSE broadcast/iota).
    col = lax.broadcasted_iota(jnp.int32, (tq, tk), 1)
    keep = col < vlen

    for h in range(num_head):            # static unroll over heads
        sl = slice(h * dh, (h + 1) * dh)
        qh = q_ref[:, sl].astype(mxu_dtype)
        kh = k_ref[:, sl].astype(mxu_dtype)
        vh = v_ref[:, sl].astype(mxu_dtype)
        # NT contraction, f32 accumulation on the MXU.
        s = lax.dot_general(qh, kh,
                            dimension_numbers=(((1,), (1,)), ((), ())),
                            preferred_element_type=jnp.float32)
        # Scale applied to f32 scores (keeps VPU math f32; safer in bf16 mode);
        # masked entries set to -1e6 (matches d2l.sequence_mask).
        s = jnp.where(keep, s * scale, jnp.float32(-1.0e6))
        s = s - jnp.max(s, axis=-1, keepdims=True)
        p = jnp.exp(s)
        p = p * pl.reciprocal(jnp.sum(p, axis=-1, keepdims=True),
                              approx=recip_approx)
        # Per-head result straight into the VMEM slab (no outs list / concat).
        slab_ref[:, sl] = jnp.dot(p.astype(mxu_dtype), vh,
                                  preferred_element_type=jnp.float32)

    # Fused output projection W_o in the epilogue: saves an HBM round trip of
    # the (B, Tq, H) attention output and a separate kernel launch.
    o_ref[...] = jnp.dot(slab_ref[...].astype(mxu_dtype),
                         wo_ref[...].astype(mxu_dtype),
                         preferred_element_type=jnp.float32).astype(o_ref.dtype)


# ---------------------------------------------------------------------------
# Parameter prep (done once at setup, not per forward).
# ---------------------------------------------------------------------------
def prepare_mha_params(Wq, Wk, Wv, Wo, *, dtype=None):
    """Weights stored as (in_features, out_features) = PyTorch weight.T, bias=False.

    Builds the stacked (3, K, H) QKV weight for the fused self-attention
    projection and optionally casts weights once (hoisted out of forward).
    """
    if dtype is not None:
        Wq, Wk, Wv, Wo = (w.astype(dtype) for w in (Wq, Wk, Wv, Wo))
    W_qkv = None
    if Wq.shape == Wk.shape == Wv.shape:
        W_qkv = jnp.stack([Wq, Wk, Wv], axis=0)   # (3, K, H)
    return {"Wq": Wq, "Wk": Wk, "Wv": Wv, "Wo": Wo, "W_qkv": W_qkv}


# ---------------------------------------------------------------------------
# MultiHeadAttention forward (bias=False, dropout = eval-mode identity)
# ---------------------------------------------------------------------------
def multi_head_attention(queries, keys, values, params, num_head, mask=None, *,
                         self_attention=False, mxu_dtype=jnp.bfloat16,
                         softmax_recip_approx=True):
    """params: dict from prepare_mha_params().

    mask: None or 1-D (B,) valid key lengths (d2l semantics: all heads of
    batch b share mask[b], i.e. torch.repeat_interleave(mask, num_head)).
    self_attention: explicit flag (the `is` identity check does not survive
    jit tracing) -> fused QKV projection + in-spec q/k/v slicing.
    mxu_dtype: dtype of matmul operands (accumulation/softmax stats stay f32).
    """
    Wq, Wk, Wv, Wo = params["Wq"], params["Wk"], params["Wv"], params["Wo"]
    B, Tq, Din_q = queries.shape
    Tk = keys.shape[1]
    H = Wq.shape[1]
    Dq_out = Wo.shape[1]
    assert H % num_head == 0
    dh = H // num_head
    out_dtype = queries.dtype
    act_dtype = mxu_dtype  # projection outputs feed the attention MXU directly

    if mask is None:
        valid_lens = jnp.full((B,), Tk, dtype=jnp.int32)  # mask is a no-op
    else:
        if mask.ndim != 1:
            # TODO(synk): 2-D per-query valid_lens branch of masked_softmax not implemented.
            raise NotImplementedError("only 1-D valid_lens mask supported")
        valid_lens = mask.astype(jnp.int32)

    tq = _pick_tile(Tq, (256, 128, 64, 32, 16, 8))

    if self_attention and params["W_qkv"] is not None:
        # Fused QKV projection -> (3, B, Tq, H); attention slices q/k/v purely
        # via BlockSpec block indices (no wrapper-side qkv[...] HBM copies).
        x2d = queries.reshape(B * Tq, Din_q)
        qkv = qkv_projection(x2d, params["W_qkv"], compute_dtype=mxu_dtype,
                             out_dtype=act_dtype).reshape(3, B, Tq, H)
        in_specs = [
            pl.BlockSpec((None, None, tq, H), lambda b, qi, vl: (0, b, qi, 0)),
            pl.BlockSpec((None, None, Tk, H), lambda b, qi, vl: (1, b, 0, 0)),
            pl.BlockSpec((None, None, Tk, H), lambda b, qi, vl: (2, b, 0, 0)),
        ]
        attn_args = (qkv, qkv, qkv)
    else:
        # TODO(synk): fuse the K/V projections into one matmul when the caller
        # guarantees keys and values are the same tensor (typical cross-attn).
        q = linear(queries.reshape(B * Tq, -1), Wq, compute_dtype=mxu_dtype,
                   out_dtype=act_dtype).reshape(B, Tq, H)
        k = linear(keys.reshape(B * Tk, -1), Wk, compute_dtype=mxu_dtype,
                   out_dtype=act_dtype).reshape(B, Tk, H)
        v = linear(values.reshape(B * Tk, -1), Wv, compute_dtype=mxu_dtype,
                   out_dtype=act_dtype).reshape(B, Tk, H)
        in_specs = [
            pl.BlockSpec((None, tq, H), lambda b, qi, vl: (b, qi, 0)),
            pl.BlockSpec((None, Tk, H), lambda b, qi, vl: (b, 0, 0)),
            pl.BlockSpec((None, Tk, H), lambda b, qi, vl: (b, 0, 0)),
        ]
        attn_args = (q, k, v)

    # TODO(synk): for long sequences, tile the KV axis with an online-softmax
    # (flash) accumulator (grid=(B, Tq//tq, Tk//tk), KV axis "arbitrary",
    # m/l/acc scratch) and pl.when-skip KV tiles past valid_lens[b].
    kern = functools.partial(_mha_attn_kernel, num_head=num_head, dh=dh,
                             scale=1.0 / math.sqrt(dh), mxu_dtype=mxu_dtype,
                             recip_approx=softmax_recip_approx)
    wo_spec = pl.BlockSpec((H, Dq_out), lambda b, qi, vl: (0, 0))
    out_spec = pl.BlockSpec((None, tq, Dq_out), lambda b, qi, vl: (b, qi, 0))

    return pl.pallas_call(
        kern,
        out_shape=jax.ShapeDtypeStruct((B, Tq, Dq_out), out_dtype),
        grid_spec=pltpu.PrefetchScalarGridSpec(
            num_scalar_prefetch=1,
            grid=(B, Tq // tq),
            in_specs=in_specs + [wo_spec],
            out_specs=out_spec,
            scratch_shapes=[pltpu.VMEM((tq, H), jnp.float32)],
        ),
        compiler_params=pltpu.CompilerParams(
            dimension_semantics=("parallel", "parallel"),
            vmem_limit_bytes=_VMEM_LIMIT,
        ),
    )(valid_lens, *attn_args, Wo)


# ---------------------------------------------------------------------------
# Pure-JAX reference for validation
# ---------------------------------------------------------------------------
def mha_reference(queries, keys, values, raw_params, num_head, mask=None):
    Wq, Wk, Wv, Wo = raw_params
    B, Tq, _ = queries.shape
    Tk = keys.shape[1]
    H = Wq.shape[1]
    dh = H // num_head

    def t_qkv(x, T):
        return (x.reshape(B, T, num_head, dh)
                 .transpose(0, 2, 1, 3)
                 .reshape(B * num_head, T, dh))

    q = t_qkv(queries @ Wq, Tq)
    k = t_qkv(keys @ Wk, Tk)
    v = t_qkv(values @ Wv, Tk)
    s = jnp.einsum("bqd,bkd->bqk", q, k) / math.sqrt(dh)
    if mask is not None:
        vl = jnp.repeat(mask, num_head)
        keep = jnp.arange(Tk)[None, None, :] < vl[:, None, None]
        s = jnp.where(keep, s, -1.0e6)
    p = jax.nn.softmax(s, axis=-1)
    o = jnp.einsum("bqk,bkd->bqd", p, v)
    o = o.reshape(B, num_head, Tq, dh).transpose(0, 2, 1, 3).reshape(B, Tq, H)
    return o @ Wo


if __name__ == "__main__":
    # Make the pure-JAX reference use full-f32 matmuls so the strict checks
    # compare against an accurate baseline.
    jax.config.update("jax_default_matmul_precision", "highest")

    B, Tq, Tk = 2, 8, 8
    query_size = key_size = value_size = 32
    num_hidden, num_head = 32, 4

    key = jax.random.PRNGKey(0)
    kq, kk, kv, kwq, kwk, kwv, kwo = jax.random.split(key, 7)

    queries = jax.random.normal(kq, (B, Tq, query_size), jnp.float32)
    keys_in = jax.random.normal(kk, (B, Tk, key_size), jnp.float32)
    values = jax.random.normal(kv, (B, Tk, value_size), jnp.float32)

    # Parameters stored as (in, out) = W_pytorch.T, bias=False.
    Wq = 0.1 * jax.random.normal(kwq, (query_size, num_hidden), jnp.float32)
    Wk = 0.1 * jax.random.normal(kwk, (key_size, num_hidden), jnp.float32)
    Wv = 0.1 * jax.random.normal(kwv, (value_size, num_hidden), jnp.float32)
    Wo = 0.1 * jax.random.normal(kwo, (num_hidden, query_size), jnp.float32)
    raw_params = (Wq, Wk, Wv, Wo)
    params = prepare_mha_params(Wq, Wk, Wv, Wo)   # once, outside the fwd path

    valid_lens = jnp.array([5, 7], dtype=jnp.int32)

    # 1) unmasked cross-attention, strict f32 operands / exact reciprocal
    out = jax.block_until_ready(multi_head_attention(
        queries, keys_in, values, params, num_head,
        mxu_dtype=jnp.float32, softmax_recip_approx=False))
    ref = mha_reference(queries, keys_in, values, raw_params, num_head)
    assert out.shape == (B, Tq, query_size)
    assert jnp.allclose(out, ref, atol=1e-4, rtol=1e-4), "unmasked f32 mismatch"

    # 2) masked (1-D valid_lens), strict f32
    out_m = jax.block_until_ready(multi_head_attention(
        queries, keys_in, values, params, num_head, mask=valid_lens,
        mxu_dtype=jnp.float32, softmax_recip_approx=False))
    ref_m = mha_reference(queries, keys_in, values, raw_params, num_head,
                          mask=valid_lens)
    assert jnp.allclose(out_m, ref_m, atol=1e-4, rtol=1e-4), "masked f32 mismatch"

    # 3) masked, default production config: bf16 MXU operands + approx recip
    out_b = jax.block_until_ready(multi_head_attention(
        queries, keys_in, values, params, num_head, mask=valid_lens))
    assert jnp.allclose(out_b, ref_m, atol=5e-2, rtol=5e-2), "bf16 mismatch"

    # 4) self-attention: fused QKV projection path (explicit flag), strict f32
    out_sf = jax.block_until_ready(multi_head_attention(
        queries, queries, queries, params, num_head, mask=valid_lens,
        self_attention=True, mxu_dtype=jnp.float32, softmax_recip_approx=False))
    ref_s = mha_reference(queries, queries, queries, raw_params, num_head,
                          mask=valid_lens)
    assert jnp.allclose(out_sf, ref_s, atol=1e-4, rtol=1e-4), "fused f32 mismatch"

    # 5) self-attention fused path, default bf16 config
    out_s = jax.block_until_ready(multi_head_attention(
        queries, queries, queries, params, num_head, mask=valid_lens,
        self_attention=True))
    assert jnp.allclose(out_s, ref_s, atol=5e-2, rtol=5e-2), "fused bf16 mismatch"

    print("KERNEL_OK")
</pallas_src>

<mosaic_0001>
module attributes {stable_mosaic.version = 11 : i64} {
  func.func @_matmul_kernel(%arg0: i32, %arg1: i32, %arg2: i32, %arg3: memref<16x32xf32, #tpu.memory_space<vmem>>, %arg4: memref<32x32xf32, #tpu.memory_space<vmem>>, %arg5: memref<16x32xf32, #tpu.memory_space<vmem>>, %arg6: memref<16x32xf32, #tpu.memory_space<vmem>>) attributes {dimension_semantics = [#tpu.dimension_semantics<parallel>, #tpu.dimension_semantics<parallel>, #tpu.dimension_semantics<arbitrary>], iteration_bounds = array<i64: 1, 1, 1>, scalar_prefetch = 0 : i64, scratch_operands = 1 : i64, tpu.core_type = #tpu.core_type<tc>, window_params = [{transform_indices = @transform_0, window_bounds = array<i64: 16, 32>}, {transform_indices = @transform_1, window_bounds = array<i64: 32, 32>}, {transform_indices = @transform_2, window_bounds = array<i64: 16, 32>}]} {
    %c0_i32 = arith.constant 0 : i32
    %0 = arith.cmpi eq, %arg2, %c0_i32 : i32
    %1 = arith.extui %0 : i1 to i32
    %c0_i32_0 = arith.constant 0 : i32
    %2 = arith.cmpi ne, %1, %c0_i32_0 : i32
    scf.if %2 {
      %cst_10 = arith.constant 0.000000e+00 : f32
      %12 = vector.broadcast %cst_10 : f32 to vector<16x32xf32>
      %c0_11 = arith.constant 0 : index
      %c0_12 = arith.constant 0 : index
      %13 = vector.load %arg6[%c0_11, %c0_12] : memref<16x32xf32, #tpu.memory_space<vmem>>, vector<16x32xf32>
      tpu.vector_store %arg6[%c0_11, %c0_12], %12 {strides = array<i32>} : memref<16x32xf32, #tpu.memory_space<vmem>>, vector<16x32xf32>,
    } else {
    }
    %c0 = arith.constant 0 : index
    %c0_1 = arith.constant 0 : index
    %3 = vector.load %arg6[%c0, %c0_1] : memref<16x32xf32, #tpu.memory_space<vmem>>, vector<16x32xf32>
    %c0_2 = arith.constant 0 : index
    %c0_3 = arith.constant 0 : index
    %4 = vector.load %arg3[%c0_2, %c0_3] : memref<16x32xf32, #tpu.memory_space<vmem>>, vector<16x32xf32>
    %c0_4 = arith.constant 0 : index
    %c0_5 = arith.constant 0 : index
    %5 = vector.load %arg4[%c0_4, %c0_5] : memref<32x32xf32, #tpu.memory_space<vmem>>, vector<32x32xf32>
    %cst = arith.constant dense<0.000000e+00> : vector<16x32xf32>
    %6 = tpu.matmul %4, %5, %cst {dimension_numbers = #tpu.dot_dimension_numbers<[1], [0], [0], [1], [0, 0, 1, 1], [], []>, precision = #tpu.contract_precision<fp32>} : vector<16x32xf32>, vector<32x32xf32>, vector<16x32xf32> -> vector<16x32xf32>
    %7 = arith.addf %3, %6 : vector<16x32xf32>
    %c0_6 = arith.constant 0 : index
    %c0_7 = arith.constant 0 : index
    %8 = vector.load %arg6[%c0_6, %c0_7] : memref<16x32xf32, #tpu.memory_space<vmem>>, vector<16x32xf32>
    tpu.vector_store %arg6[%c0_6, %c0_7], %7 {strides = array<i32>} : memref<16x32xf32, #tpu.memory_space<vmem>>, vector<16x32xf32>,
    %c0_i32_8 = arith.constant 0 : i32
    %9 = arith.cmpi eq, %arg2, %c0_i32_8 : i32
    %10 = arith.extui %9 : i1 to i32
    %c0_i32_9 = arith.constant 0 : i32
    %11 = arith.cmpi ne, %10, %c0_i32_9 : i32
    scf.if %11 {
      %c0_10 = arith.constant 0 : index
      %c0_11 = arith.constant 0 : index
      %12 = vector.load %arg6[%c0_10, %c0_11] : memref<16x32xf32, #tpu.memory_space<vmem>>, vector<16x32xf32>
      %c0_12 = arith.constant 0 : index
      %c0_13 = arith.constant 0 : index
      %13 = vector.load %arg5[%c0_12, %c0_13] : memref<16x32xf32, #tpu.memory_space<vmem>>, vector<16x32xf32>
      tpu.vector_store %arg5[%c0_12, %c0_13], %12 {strides = array<i32>} : memref<16x32xf32, #tpu.memory_space<vmem>>, vector<16x32xf32>,
    } else {
    }
    return
  }
  func.func @transform_0(%arg0: i32, %arg1: i32, %arg2: i32) -> (i32, i32) {
    %c0_i32 = arith.constant 0 : i32
    return %arg0, %arg2 : i32, i32
  }
  func.func @transform_1(%arg0: i32, %arg1: i32, %arg2: i32) -> (i32, i32) {
    %c0_i32 = arith.constant 0 : i32
    return %arg2, %arg1 : i32, i32
  }
  func.func @transform_2(%arg0: i32, %arg1: i32, %arg2: i32) -> (i32, i32) {
    %c0_i32 = arith.constant 0 : i32
    return %arg0, %arg1 : i32, i32
  }
}

</mosaic_0001>

<llo_original>
// kernel: tpu_custom_call.1
$region0: #{tpu_custom_call.1}
  #allocation0 [shape = 'u32[]', space=smem, size = 0x4, offset = 0x4, fixed_abs, tag = 'smem constant byte address 0x4 - core index']
  #allocation1 [shape = 'u32[144,128]{1,0:T(1,128)}', space=vmem, size = 0x12000, scoped, tag = 'internal scratch']
  #allocation2 [shape = 'f32[16,32]{1,0:T(8,128)}', space=vmem, size = 0x2000, scoped, tag = 'scratch operand']
  %s0 = inlined_call_operand.hbm [shape: f32[16,32], index: 0, kind: input, shape index: {}]
  %s1 = inlined_call_operand.hbm [shape: f32[32,32], index: 1, kind: input, shape index: {}]
  %s2 = inlined_call_operand.hbm [shape: f32[16,32], index: 2, kind: output, shape index: {}]
  %s3 = sld [smem:[#allocation0]]
  $region34: #{tpu_custom_call.1} parent=0
    _
  %s5 = ssub.s32 1, %s3
  %s6 = scalar_select 0, %s5, %s3
  $region1: #{tpu_custom_call.1} parent=0
    #allocation3 [shape = 'u8[8192]{0}', space=vmem, size = 0x2000, scoped, tag = 'input window, operand 0, single buffered']
    #allocation4 [shape = 's32[1]{0}', space=sflag, size = 0x4, scoped, tag = 'scoped memory for tpu_custom_call.1']
    #allocation5 [shape = 's32[1]{0}', space=sflag, size = 0x4, scoped, tag = 'scoped memory for tpu_custom_call.1']
    #allocation6 [shape = 'u8[16384]{0}', space=vmem, size = 0x4000, scoped, tag = 'input window, operand 1, single buffered']
    #allocation7 [shape = 's32[1]{0}', space=sflag, size = 0x4, scoped, tag = 'scoped memory for tpu_custom_call.1']
    #allocation8 [shape = 'u8[8192]{0}', space=vmem, size = 0x2000, scoped, tag = 'output window, operand 0, single buffered']
    %7 = vsyncpa [#allocation4], 0
    %8 = vsyncpa [#allocation7], 0
    %9 = vsyncpa [#allocation5], 0
    // Predicated region
    $region2: #{tpu_custom_call.1} parent=1 // pred_check
      _
    $region3: #{tpu_custom_call.1} parent=1 // pred_check_branch
      %11 = sbr.rel (0) target = $region5
    $region4: #{tpu_custom_call.1} parent=1 // pred_region
      %s13 = ssub.s32 256, 256
      %14 = vsyncadd [#allocation4], %s13
      %s15 = sshll.u32 [#allocation3], 4
      %s16 = int_to_ptr.vmem [resolvable:$true] %s15
      %21 = dma.hbm_to_vmem [thread:$0]  %s0, 256, %s16, [#allocation4], 128, 128, 8
    $region5: #{tpu_custom_call.1} parent=1 // pred_fallthru
      _
    // Predicated region
    $region6: #{tpu_custom_call.1} parent=1 // pred_check
      _
    $region7: #{tpu_custom_call.1} parent=1 // pred_check_branch
      %23 = sbr.rel (0) target = $region9
    $region8: #{tpu_custom_call.1} parent=1 // pred_region
      %s25 = ssub.s32 512, 512
      %26 = vsyncadd [#allocation7], %s25
      %s27 = sshll.u32 [#allocation6], 4
      %s28 = int_to_ptr.vmem [resolvable:$true] %s27
      %33 = dma.hbm_to_vmem [thread:$0]  %s1, 512, %s28, [#allocation7], 128, 128, 8
    $region9: #{tpu_custom_call.1} parent=1 // pred_fallthru
      _
    // Predicated region
    $region10: #{tpu_custom_call.1} parent=1 // pred_check
      _
    $region11: #{tpu_custom_call.1} parent=1 // pred_check_branch
      %35 = sbr.rel (0) target = $region13
    $region12: #{tpu_custom_call.1} parent=1 // pred_region
      %36 = dma.done [#allocation4], 256
    $region13: #{tpu_custom_call.1} parent=1 // pred_fallthru
      _
    // Predicated region
    $region14: #{tpu_custom_call.1} parent=1 // pred_check
      _
    $region15: #{tpu_custom_call.1} parent=1 // pred_check_branch
      %38 = sbr.rel (0) target = $region17
    $region16: #{tpu_custom_call.1} parent=1 // pred_region
      %39 = dma.done [#allocation7], 512
    $region17: #{tpu_custom_call.1} parent=1 // pred_fallthru
      _
    %p40 = scmp.eq.s32.totalorder 0, 0
    // Predicated region
    $region18: #{tpu_custom_call.1} parent=1 // pred_check
      %p41 = pneg %p40
    $region19: #{tpu_custom_call.1} parent=1 // pred_check_branch
      %43 = sbr.rel (%p41) target = $region21
    $region20: #{tpu_custom_call.1} parent=1 // pred_region
      %vm44 = vcmask 261120
      %45 = vst.msk [vmem:[#allocation2] sm:$0xff] %vm44, 0.0
      %46 = vst.msk [vmem:[#allocation2 + $0x8] sm:$0xff] %vm44, 0.0
    $region21: #{tpu_custom_call.1} parent=1 // pred_fallthru
      _
    %v47 = vld [vmem:[#allocation2] sm:$0xff]
    %v48 = vld [vmem:[#allocation2 + $0x8] sm:$0xff]
    %v49 = vld [vmem:[#allocation3] sm:$0xff]
    %v50 = vld [vmem:[#allocation3 + $0x8] sm:$0xff]
    %v51 = vld [vmem:[#allocation6] sm:$0xff]
    %v52 = vld [vmem:[#allocation6 + $0x8] sm:$0xff]
    %v53 = vld [vmem:[#allocation6 + $0x10] sm:$0xff]
    %v54 = vld [vmem:[#allocation6 + $0x18] sm:$0xff]
    %vm55 = vcmask 261120
    %v57 = vsel %vm55, %v49, 0
    %v60 = vsel %vm55, %v50, 0
    %62 = vmatprep.subr.mxu0 0.0
    %63 = vmatpush1.msra.mxu0 0.0
    %64 = vmatprep.subr.mxu0 0.0
    %65 = vmatpush1.msra.mxu0 0.0
    %66 = vmatprep.subr.mxu0 0.0
    %67 = vmatpush1.msra.mxu0 0.0
    %68 = vmatprep.subr.mxu0 0.0
    %69 = vmatpush1.msra.mxu0 0.0
    %70 = vmatprep.subr.mxu0 0.0
    %71 = vmatpush1.msra.mxu0 0.0
    %72 = vmatprep.subr.mxu0 0.0
    %73 = vmatpush1.msra.mxu0 0.0
    %74 = vmatprep.subr.mxu0 0.0
    %75 = vmatpush1.msra.mxu0 0.0
    %76 = vmatprep.subr.mxu0 0.0
    %77 = vmatpush1.msra.mxu0 0.0
    %78 = vmatprep.subr.mxu0 0.0
    %79 = vmatpush1.msra.mxu0 0.0
    %80 = vmatprep.subr.mxu0 0.0
    %81 = vmatpush1.msra.mxu0 0.0
    %82 = vmatprep.subr.mxu0 0.0
    %83 = vmatpush1.msra.mxu0 0.0
    %84 = vmatprep.subr.mxu0 0.0
    %85 = vmatpush1.msra.mxu0 0.0
    %86 = vmatprep.subr.mxu0 0.0
    %v87 = vand.u32 %v54, 4294901760
    %88 = vmatpush1.msra.mxu0 %v87
    %89 = vmatprep.subr.mxu0 0.0
    %v90 = vand.u32 %v53, 4294901760
    %91 = vmatpush1.msra.mxu0 %v90
    %92 = vmatprep.subr.mxu0 0.0
    %v93 = vand.u32 %v52, 4294901760
    %94 = vmatpush1.msra.mxu0 %v93
    %95 = vmatprep.subr.mxu0 0.0
    %v96 = vand.u32 %v51, 4294901760
    %97 = vmatpush1.msra.mxu0 %v96
    %98 = vmatprep.subr.mxu0 0.0
    %99 = vmatpush2.msra.mxu0 0.0
    %100 = vmatprep.subr.mxu0 0.0
    %101 = vmatpush2.msra.mxu0 0.0
    %102 = vmatprep.subr.mxu0 0.0
    %103 = vmatpush2.msra.mxu0 0.0
    %104 = vmatprep.subr.mxu0 0.0
    %105 = vmatpush2.msra.mxu0 0.0
    %106 = vmatprep.subr.mxu0 0.0
    %107 = vmatpush2.msra.mxu0 0.0
    %108 = vmatprep.subr.mxu0 0.0
    %109 = vmatpush2.msra.mxu0 0.0
    %110 = vmatprep.subr.mxu0 0.0
    %111 = vmatpush2.msra.mxu0 0.0
    %112 = vmatprep.subr.mxu0 0.0
    %113 = vmatpush2.msra.mxu0 0.0
    %114 = vmatprep.subr.mxu0 0.0
    %115 = vmatpush2.msra.mxu0 0.0
    %116 = vmatprep.subr.mxu0 0.0
    %117 = vmatpush2.msra.mxu0 0.0
    %118 = vmatprep.subr.mxu0 0.0
    %119 = vmatpush2.msra.mxu0 0.0
    %120 = vmatprep.subr.mxu0 0.0
    %121 = vmatpush2.msra.mxu0 0.0
    %122 = vmatprep.subr.mxu0 0.0
    %123 = vmatpush2.msra.mxu0 0.0
    %124 = vmatprep.subr.mxu0 0.0
    %125 = vmatpush2.msra.mxu0 0.0
    %126 = vmatprep.subr.mxu0 0.0
    %127 = vmatpush2.msra.mxu0 0.0
    %128 = vmatprep.subr.mxu0 0.0
    %129 = vmatpush2.msra.mxu0 0.0
    %130 = vmatprep.mubr.f32.mxu0 0.0
    %v131 = vand.u32 %v57, 4294901760
    %v132 = vsub.f32 %v57, %v131
    %v133 = vand.u32 %v132, 4294901760
    %v134 = vsub.f32 %v132, %v133
    %v135 = vand.u32 %v134, 4294901760
    %136 = vmatmul.mubr.f32.gmra.mxu0 %v135
    %v137 = vpop.f32.mrf.mxu0
    %v138 = vadd.f32 0.0, %v137
    %v139 = vpop.f32.mrf.mxu0
    %140 = vmatprep.mubr.f32.mxu0 0.0
    %v141 = vand.u32 %v60, 4294901760
    %v142 = vsub.f32 %v60, %v141
    %v143 = vand.u32 %v142, 4294901760
    %v144 = vsub.f32 %v142, %v143
    %v145 = vand.u32 %v144, 4294901760
    %146 = vmatmul.mubr.f32.gmra.mxu0 %v145
    %v147 = vpop.f32.mrf.mxu0
    %v148 = vadd.f32 0.0, %v147
    %v149 = vpop.f32.mrf.mxu0
    %150 = vdwg.mxu0
    %151 = vmatprep.subr.mxu0 0.0
    %152 = vmatpush1.msra.mxu0 0.0
    %153 = vmatprep.subr.mxu0 0.0
    %154 = vmatpush1.msra.mxu0 0.0
    %155 = vmatprep.subr.mxu0 0.0
    %156 = vmatpush1.msra.mxu0 0.0
    %157 = vmatprep.subr.mxu0 0.0
    %158 = vmatpush1.msra.mxu0 0.0
    %159 = vmatprep.subr.mxu0 0.0
    %160 = vmatpush1.msra.mxu0 0.0
    %161 = vmatprep.subr.mxu0 0.0
    %162 = vmatpush1.msra.mxu0 0.0
    %163 = vmatprep.subr.mxu0 0.0
    %164 = vmatpush1.msra.mxu0 0.0
    %165 = vmatprep.subr.mxu0 0.0
    %166 = vmatpush1.msra.mxu0 0.0
    %167 = vmatprep.subr.mxu0 0.0
    %168 = vmatpush1.msra.mxu0 0.0
    %169 = vmatprep.subr.mxu0 0.0
    %170 = vmatpush1.msra.mxu0 0.0
    %171 = vmatprep.subr.mxu0 0.0
    %172 = vmatpush1.msra.mxu0 0.0
    %173 = vmatprep.subr.mxu0 0.0
    %174 = vmatpush1.msra.mxu0 0.0
    %175 = vmatprep.subr.mxu0 0.0
    %v176 = vand.u32 %v54, 4294901760
    %v177 = vsub.f32 %v54, %v176
    %v178 = vand.u32 %v177, 4294901760
    %v179 = vsub.f32 %v177, %v178
    %v180 = vand.u32 %v179, 4294901760
    %181 = vmatpush1.msra.mxu0 %v180
    %182 = vmatprep.subr.mxu0 0.0
    %v183 = vand.u32 %v53, 4294901760
    %v184 = vsub.f32 %v53, %v183
    %v185 = vand.u32 %v184, 4294901760
    %v186 = vsub.f32 %v184, %v185
    %v187 = vand.u32 %v186, 4294901760
    %188 = vmatpush1.msra.mxu0 %v187
    %189 = vmatprep.subr.mxu0 0.0
    %v190 = vand.u32 %v52, 4294901760
    %v191 = vsub.f32 %v52, %v190
    %v192 = vand.u32 %v191, 4294901760
    %v193 = vsub.f32 %v191, %v192
    %v194 = vand.u32 %v193, 4294901760
    %195 = vmatpush1.msra.mxu0 %v194
    %196 = vmatprep.subr.mxu0 0.0
    %v197 = vand.u32 %v51, 4294901760
    %v198 = vsub.f32 %v51, %v197
    %v199 = vand.u32 %v198, 4294901760
    %v200 = vsub.f32 %v198, %v199
    %v201 = vand.u32 %v200, 4294901760
    %202 = vmatpush1.msra.mxu0 %v201
    %203 = vmatprep.subr.mxu0 0.0
    %204 = vmatpush2.msra.mxu0 0.0
    %205 = vmatprep.subr.mxu0 0.0
    %206 = vmatpush2.msra.mxu0 0.0
    %207 = vmatprep.subr.mxu0 0.0
    %208 = vmatpush2.msra.mxu0 0.0
    %209 = vmatprep.subr.mxu0 0.0
    %210 = vmatpush2.msra.mxu0 0.0
    %211 = vmatprep.subr.mxu0 0.0
    %212 = vmatpush2.msra.mxu0 0.0
    %213 = vmatprep.subr.mxu0 0.0
    %214 = vmatpush2.msra.mxu0 0.0
    %215 = vmatprep.subr.mxu0 0.0
    %216 = vmatpush2.msra.mxu0 0.0
    %217 = vmatprep.subr.mxu0 0.0
    %218 = vmatpush2.msra.mxu0 0.0
    %219 = vmatprep.subr.mxu0 0.0
    %220 = vmatpush2.msra.mxu0 0.0
    %221 = vmatprep.subr.mxu0 0.0
    %222 = vmatpush2.msra.mxu0 0.0
    %223 = vmatprep.subr.mxu0 0.0
    %224 = vmatpush2.msra.mxu0 0.0
    %225 = vmatprep.subr.mxu0 0.0
    %226 = vmatpush2.msra.mxu0 0.0
    %227 = vmatprep.subr.mxu0 0.0
    %228 = vmatpush2.msra.mxu0 0.0
    %229 = vmatprep.subr.mxu0 0.0
    %230 = vmatpush2.msra.mxu0 0.0
    %231 = vmatprep.subr.mxu0 0.0
    %232 = vmatpush2.msra.mxu0 0.0
    %233 = vmatprep.subr.mxu0 0.0
    %234 = vmatpush2.msra.mxu0 0.0
    %235 = vmatprep.mubr.f32.mxu0 0.0
    %v236 = vand.u32 %v57, 4294901760
    %237 = vmatmul.mubr.f32.gmra.mxu0 %v236
    %v238 = vpop.f32.mrf.mxu0
    %v239 = vadd.f32 %v138, %v238
    %v240 = vpop.f32.mrf.mxu0
    %241 = vmatprep.mubr.f32.mxu0 0.0
    %v242 = vand.u32 %v60, 4294901760
    %243 = vmatmul.mubr.f32.gmra.mxu0 %v242
    %v244 = vpop.f32.mrf.mxu0
    %v245 = vadd.f32 %v148, %v244
    %v246 = vpop.f32.mrf.mxu0
    %247 = vdwg.mxu0
    %248 = vmatprep.subr.mxu0 0.0
    %249 = vmatpush1.msra.mxu0 0.0
    %250 = vmatprep.subr.mxu0 0.0
    %251 = vmatpush1.msra.mxu0 0.0
    %252 = vmatprep.subr.mxu0 0.0
    %253 = vmatpush1.msra.mxu0 0.0
    %254 = vmatprep.subr.mxu0 0.0
    %255 = vmatpush1.msra.mxu0 0.0
    %256 = vmatprep.subr.mxu0 0.0
    %257 = vmatpush1.msra.mxu0 0.0
    %258 = vmatprep.subr.mxu0 0.0
    %259 = vmatpush1.msra.mxu0 0.0
    %260 = vmatprep.subr.mxu0 0.0
    %261 = vmatpush1.msra.mxu0 0.0
    %262 = vmatprep.subr.mxu0 0.0
    %263 = vmatpush1.msra.mxu0 0.0
    %264 = vmatprep.subr.mxu0 0.0
    %265 = vmatpush1.msra.mxu0 0.0
    %266 = vmatprep.subr.mxu0 0.0
    %267 = vmatpush1.msra.mxu0 0.0
    %268 = vmatprep.subr.mxu0 0.0
    %269 = vmatpush1.msra.mxu0 0.0
    %270 = vmatprep.subr.mxu0 0.0
    %271 = vmatpush1.msra.mxu0 0.0
    %272 = vmatprep.subr.mxu0 0.0
    %v273 = vand.u32 %v54, 4294901760
    %v274 = vsub.f32 %v54, %v273
    %275 = vmatpush1.msra.mxu0 %v274
    %276 = vmatprep.subr.mxu0 0.0
    %v277 = vand.u32 %v53, 4294901760
    %v278 = vsub.f32 %v53, %v277
    %279 = vmatpush1.msra.mxu0 %v278
    %280 = vmatprep.subr.mxu0 0.0
    %v281 = vand.u32 %v52, 4294901760
    %v282 = vsub.f32 %v52, %v281
    %283 = vmatpush1.msra.mxu0 %v282
    %284 = vmatprep.subr.mxu0 0.0
    %v285 = vand.u32 %v51, 4294901760
    %v286 = vsub.f32 %v51, %v285
    %287 = vmatpush1.msra.mxu0 %v286
    %288 = vmatprep.subr.mxu0 0.0
    %289 = vmatpush2.msra.mxu0 0.0
    %290 = vmatprep.subr.mxu0 0.0
    %291 = vmatpush2.msra.mxu0 0.0
    %292 = vmatprep.subr.mxu0 0.0
    %293 = vmatpush2.msra.mxu0 0.0
    %294 = vmatprep.subr.mxu0 0.0
    %295 = vmatpush2.msra.mxu0 0.0
    %296 = vmatprep.subr.mxu0 0.0
    %297 = vmatpush2.msra.mxu0 0.0
    %298 = vmatprep.subr.mxu0 0.0
    %299 = vmatpush2.msra.mxu0 0.0
    %300 = vmatprep.subr.mxu0 0.0
    %301 = vmatpush2.msra.mxu0 0.0
    %302 = vmatprep.subr.mxu0 0.0
    %303 = vmatpush2.msra.mxu0 0.0
    %304 = vmatprep.subr.mxu0 0.0
    %305 = vmatpush2.msra.mxu0 0.0
    %306 = vmatprep.subr.mxu0 0.0
    %307 = vmatpush2.msra.mxu0 0.0
    %308 = vmatprep.subr.mxu0 0.0
    %309 = vmatpush2.msra.mxu0 0.0
    %310 = vmatprep.subr.mxu0 0.0
    %311 = vmatpush2.msra.mxu0 0.0
    %312 = vmatprep.subr.mxu0 0.0
    %313 = vmatpush2.msra.mxu0 0.0
    %314 = vmatprep.subr.mxu0 0.0
    %315 = vmatpush2.msra.mxu0 0.0
    %316 = vmatprep.subr.mxu0 0.0
    %317 = vmatpush2.msra.mxu0 0.0
    %318 = vmatprep.subr.mxu0 0.0
    %319 = vmatpush2.msra.mxu0 0.0
    %320 = vmatprep.mubr.f32.mxu0 0.0
    %v321 = vand.u32 %v57, 4294901760
    %v322 = vsub.f32 %v57, %v321
    %323 = vmatmul.mubr.f32.gmra.mxu0 %v322
    %v324 = vpop.f32.mrf.mxu0
    %v325 = vadd.f32 %v239, %v324
    %v326 = vpop.f32.mrf.mxu0
    %327 = vmatprep.mubr.f32.mxu0 0.0
    %v328 = vand.u32 %v60, 4294901760
    %v329 = vsub.f32 %v60, %v328
    %330 = vmatmul.mubr.f32.gmra.mxu0 %v329
    %v331 = vpop.f32.mrf.mxu0
    %v332 = vadd.f32 %v245, %v331
    %v333 = vpop.f32.mrf.mxu0
    %334 = vdwg.mxu0
    %335 = vmatprep.subr.mxu0 0.0
    %336 = vmatpush1.msra.mxu0 0.0
    %337 = vmatprep.subr.mxu0 0.0
    %338 = vmatpush1.msra.mxu0 0.0
    %339 = vmatprep.subr.mxu0 0.0
    %340 = vmatpush1.msra.mxu0 0.0
    %341 = vmatprep.subr.mxu0 0.0
    %342 = vmatpush1.msra.mxu0 0.0
    %343 = vmatprep.subr.mxu0 0.0
    %344 = vmatpush1.msra.mxu0 0.0
    %345 = vmatprep.subr.mxu0 0.0
    %346 = vmatpush1.msra.mxu0 0.0
    %347 = vmatprep.subr.mxu0 0.0
    %348 = vmatpush1.msra.mxu0 0.0
    %349 = vmatprep.subr.mxu0 0.0
    %350 = vmatpush1.msra.mxu0 0.0
    %351 = vmatprep.subr.mxu0 0.0
    %352 = vmatpush1.msra.mxu0 0.0
    %353 = vmatprep.subr.mxu0 0.0
    %354 = vmatpush1.msra.mxu0 0.0
    %355 = vmatprep.subr.mxu0 0.0
    %356 = vmatpush1.msra.mxu0 0.0
    %357 = vmatprep.subr.mxu0 0.0
    %358 = vmatpush1.msra.mxu0 0.0
    %359 = vmatprep.subr.mxu0 0.0
    %v360 = vand.u32 %v54, 4294901760
    %361 = vmatpush1.msra.mxu0 %v360
    %362 = vmatprep.subr.mxu0 0.0
    %v363 = vand.u32 %v53, 4294901760
    %364 = vmatpush1.msra.mxu0 %v363
    %365 = vmatprep.subr.mxu0 0.0
    %v366 = vand.u32 %v52, 4294901760
    %367 = vmatpush1.msra.mxu0 %v366
    %368 = vmatprep.subr.mxu0 0.0
    %v369 = vand.u32 %v51, 4294901760
    %370 = vmatpush1.msra.mxu0 %v369
    %371 = vmatprep.subr.mxu0 0.0
    %372 = vmatpush2.msra.mxu0 0.0
    %373 = vmatprep.subr.mxu0 0.0
    %374 = vmatpush2.msra.mxu0 0.0
    %375 = vmatprep.subr.mxu0 0.0
    %376 = vmatpush2.msra.mxu0 0.0
    %377 = vmatprep.subr.mxu0 0.0
    %378 = vmatpush2.msra.mxu0 0.0
    %379 = vmatprep.subr.mxu0 0.0
    %380 = vmatpush2.msra.mxu0 0.0
    %381 = vmatprep.subr.mxu0 0.0
    %382 = vmatpush2.msra.mxu0 0.0
    %383 = vmatprep.subr.mxu0 0.0
    %384 = vmatpush2.msra.mxu0 0.0
    %385 = vmatprep.subr.mxu0 0.0
    %386 = vmatpush2.msra.mxu0 0.0
    %387 = vmatprep.subr.mxu0 0.0
    %388 = vmatpush2.msra.mxu0 0.0
    %389 = vmatprep.subr.mxu0 0.0
    %390 = vmatpush2.msra.mxu0 0.0
    %391 = vmatprep.subr.mxu0 0.0
    %392 = vmatpush2.msra.mxu0 0.0
    %393 = vmatprep.subr.mxu0 0.0
    %394 = vmatpush2.msra.mxu0 0.0
    %395 = vmatprep.subr.mxu0 0.0
    %396 = vmatpush2.msra.mxu0 0.0
    %397 = vmatprep.subr.mxu0 0.0
    %398 = vmatpush2.msra.mxu0 0.0
    %399 = vmatprep.subr.mxu0 0.0
    %400 = vmatpush2.msra.mxu0 0.0
    %401 = vmatprep.subr.mxu0 0.0
    %402 = vmatpush2.msra.mxu0 0.0
    %403 = vmatprep.mubr.f32.mxu0 0.0
    %v404 = vand.u32 %v57, 4294901760
    %v405 = vsub.f32 %v57, %v404
    %v406 = vand.u32 %v405, 4294901760
    %407 = vmatmul.mubr.f32.gmra.mxu0 %v406
    %v408 = vpop.f32.mrf.mxu0
    %v409 = vadd.f32 %v325, %v408
    %v410 = vpop.f32.mrf.mxu0
    %411 = vmatprep.mubr.f32.mxu0 0.0
    %v412 = vand.u32 %v60, 4294901760
    %v413 = vsub.f32 %v60, %v412
    %v414 = vand.u32 %v413, 4294901760
    %415 = vmatmul.mubr.f32.gmra.mxu0 %v414
    %v416 = vpop.f32.mrf.mxu0
    %v417 = vadd.f32 %v332, %v416
    %v418 = vpop.f32.mrf.mxu0
    %419 = vdwg.mxu0
    %420 = vmatprep.subr.mxu0 0.0
    %421 = vmatpush1.msra.mxu0 0.0
    %422 = vmatprep.subr.mxu0 0.0
    %423 = vmatpush1.msra.mxu0 0.0
    %424 = vmatprep.subr.mxu0 0.0
    %425 = vmatpush1.msra.mxu0 0.0
    %426 = vmatprep.subr.mxu0 0.0
    %427 = vmatpush1.msra.mxu0 0.0
    %428 = vmatprep.subr.mxu0 0.0
    %429 = vmatpush1.msra.mxu0 0.0
    %430 = vmatprep.subr.mxu0 0.0
    %431 = vmatpush1.msra.mxu0 0.0
    %432 = vmatprep.subr.mxu0 0.0
    %433 = vmatpush1.msra.mxu0 0.0
    %434 = vmatprep.subr.mxu0 0.0
    %435 = vmatpush1.msra.mxu0 0.0
    %436 = vmatprep.subr.mxu0 0.0
    %437 = vmatpush1.msra.mxu0 0.0
    %438 = vmatprep.subr.mxu0 0.0
    %439 = vmatpush1.msra.mxu0 0.0
    %440 = vmatprep.subr.mxu0 0.0
    %441 = vmatpush1.msra.mxu0 0.0
    %442 = vmatprep.subr.mxu0 0.0
    %443 = vmatpush1.msra.mxu0 0.0
    %444 = vmatprep.subr.mxu0 0.0
    %v445 = vand.u32 %v54, 4294901760
    %v446 = vsub.f32 %v54, %v445
    %v447 = vand.u32 %v446, 4294901760
    %448 = vmatpush1.msra.mxu0 %v447
    %449 = vmatprep.subr.mxu0 0.0
    %v450 = vand.u32 %v53, 4294901760
    %v451 = vsub.f32 %v53, %v450
    %v452 = vand.u32 %v451, 4294901760
    %453 = vmatpush1.msra.mxu0 %v452
    %454 = vmatprep.subr.mxu0 0.0
    %v455 = vand.u32 %v52, 4294901760
    %v456 = vsub.f32 %v52, %v455
    %v457 = vand.u32 %v456, 4294901760
    %458 = vmatpush1.msra.mxu0 %v457
    %459 = vmatprep.subr.mxu0 0.0
    %v460 = vand.u32 %v51, 4294901760
    %v461 = vsub.f32 %v51, %v460
    %v462 = vand.u32 %v461, 4294901760
    %463 = vmatpush1.msra.mxu0 %v462
    %464 = vmatprep.subr.mxu0 0.0
    %465 = vmatpush2.msra.mxu0 0.0
    %466 = vmatprep.subr.mxu0 0.0
    %467 = vmatpush2.msra.mxu0 0.0
    %468 = vmatprep.subr.mxu0 0.0
    %469 = vmatpush2.msra.mxu0 0.0
    %470 = vmatprep.subr.mxu0 0.0
    %471 = vmatpush2.msra.mxu0 0.0
    %472 = vmatprep.subr.mxu0 0.0
    %473 = vmatpush2.msra.mxu0 0.0
    %474 = vmatprep.subr.mxu0 0.0
    %475 = vmatpush2.msra.mxu0 0.0
    %476 = vmatprep.subr.mxu0 0.0
    %477 = vmatpush2.msra.mxu0 0.0
    %478 = vmatprep.subr.mxu0 0.0
    %479 = vmatpush2.msra.mxu0 0.0
    %480 = vmatprep.subr.mxu0 0.0
    %481 = vmatpush2.msra.mxu0 0.0
    %482 = vmatprep.subr.mxu0 0.0
    %483 = vmatpush2.msra.mxu0 0.0
    %484 = vmatprep.subr.mxu0 0.0
    %485 = vmatpush2.msra.mxu0 0.0
    %486 = vmatprep.subr.mxu0 0.0
    %487 = vmatpush2.msra.mxu0 0.0
    %488 = vmatprep.subr.mxu0 0.0
    %489 = vmatpush2.msra.mxu0 0.0
    %490 = vmatprep.subr.mxu0 0.0
    %491 = vmatpush2.msra.mxu0 0.0
    %492 = vmatprep.subr.mxu0 0.0
    %493 = vmatpush2.msra.mxu0 0.0
    %494 = vmatprep.subr.mxu0 0.0
    %495 = vmatpush2.msra.mxu0 0.0
    %496 = vmatprep.mubr.f32.mxu0 0.0
    %v497 = vand.u32 %v57, 4294901760
    %498 = vmatmul.mubr.f32.gmra.mxu0 %v497
    %v499 = vpop.f32.mrf.mxu0
    %v500 = vadd.f32 %v409, %v499
    %v501 = vpop.f32.mrf.mxu0
    %502 = vmatprep.mubr.f32.mxu0 0.0
    %v503 = vand.u32 %v60, 4294901760
    %504 = vmatmul.mubr.f32.gmra.mxu0 %v503
    %v505 = vpop.f32.mrf.mxu0
    %v506 = vadd.f32 %v417, %v505
    %v507 = vpop.f32.mrf.mxu0
    %508 = vdwg.mxu0
    %509 = vmatprep.subr.mxu0 0.0
    %510 = vmatpush1.msra.mxu0 0.0
    %511 = vmatprep.subr.mxu0 0.0
    %512 = vmatpush1.msra.mxu0 0.0
    %513 = vmatprep.subr.mxu0 0.0
    %514 = vmatpush1.msra.mxu0 0.0
    %515 = vmatprep.subr.mxu0 0.0
    %516 = vmatpush1.msra.mxu0 0.0
    %517 = vmatprep.subr.mxu0 0.0
    %518 = vmatpush1.msra.mxu0 0.0
    %519 = vmatprep.subr.mxu0 0.0
    %520 = vmatpush1.msra.mxu0 0.0
    %521 = vmatprep.subr.mxu0 0.0
    %522 = vmatpush1.msra.mxu0 0.0
    %523 = vmatprep.subr.mxu0 0.0
    %524 = vmatpush1.msra.mxu0 0.0
    %525 = vmatprep.subr.mxu0 0.0
    %526 = vmatpush1.msra.mxu0 0.0
    %527 = vmatprep.subr.mxu0 0.0
    %528 = vmatpush1.msra.mxu0 0.0
    %529 = vmatprep.subr.mxu0 0.0
    %530 = vmatpush1.msra.mxu0 0.0
    %531 = vmatprep.subr.mxu0 0.0
    %532 = vmatpush1.msra.mxu0 0.0
    %533 = vmatprep.subr.mxu0 0.0
    %v534 = vand.u32 %v54, 4294901760
    %535 = vmatpush1.msra.mxu0 %v534
    %536 = vmatprep.subr.mxu0 0.0
    %v537 = vand.u32 %v53, 4294901760
    %538 = vmatpush1.msra.mxu0 %v537
    %539 = vmatprep.subr.mxu0 0.0
    %v540 = vand.u32 %v52, 4294901760
    %541 = vmatpush1.msra.mxu0 %v540
    %542 = vmatprep.subr.mxu0 0.0
    %v543 = vand.u32 %v51, 4294901760
    %544 = vmatpush1.msra.mxu0 %v543
    %545 = vmatprep.subr.mxu0 0.0
    %546 = vmatpush2.msra.mxu0 0.0
    %547 = vmatprep.subr.mxu0 0.0
    %548 = vmatpush2.msra.mxu0 0.0
    %549 = vmatprep.subr.mxu0 0.0
    %550 = vmatpush2.msra.mxu0 0.0
    %551 = vmatprep.subr.mxu0 0.0
    %552 = vmatpush2.msra.mxu0 0.0
    %553 = vmatprep.subr.mxu0 0.0
    %554 = vmatpush2.msra.mxu0 0.0
    %555 = vmatprep.subr.mxu0 0.0
    %556 = vmatpush2.msra.mxu0 0.0
    %557 = vmatprep.subr.mxu0 0.0
    %558 = vmatpush2.msra.mxu0 0.0
    %559 = vmatprep.subr.mxu0 0.0
    %560 = vmatpush2.msra.mxu0 0.0
    %561 = vmatprep.subr.mxu0 0.0
    %562 = vmatpush2.msra.mxu0 0.0
    %563 = vmatprep.subr.mxu0 0.0
    %564 = vmatpush2.msra.mxu0 0.0
    %565 = vmatprep.subr.mxu0 0.0
    %566 = vmatpush2.msra.mxu0 0.0
    %567 = vmatprep.subr.mxu0 0.0
    %568 = vmatpush2.msra.mxu0 0.0
    %569 = vmatprep.subr.mxu0 0.0
    %570 = vmatpush2.msra.mxu0 0.0
    %571 = vmatprep.subr.mxu0 0.0
    %572 = vmatpush2.msra.mxu0 0.0
    %573 = vmatprep.subr.mxu0 0.0
    %574 = vmatpush2.msra.mxu0 0.0
    %575 = vmatprep.subr.mxu0 0.0
    %576 = vmatpush2.msra.mxu0 0.0
    %577 = vmatprep.mubr.f32.mxu0 0.0
    %v578 = vand.u32 %v57, 4294901760
    %579 = vmatmul.mubr.f32.gmra.mxu0 %v578
    %v580 = vpop.f32.mrf.mxu0
    %v581 = vadd.f32 %v500, %v580
    %v582 = vpop.f32.mrf.mxu0
    %583 = vmatprep.mubr.f32.mxu0 0.0
    %v584 = vand.u32 %v60, 4294901760
    %585 = vmatmul.mubr.f32.gmra.mxu0 %v584
    %v586 = vpop.f32.mrf.mxu0
    %v587 = vadd.f32 %v506, %v586
    %v588 = vpop.f32.mrf.mxu0
    %589 = vdwg.mxu0
    %v590 = vadd.f32 %v47, %v581
    %v591 = vadd.f32 %v48, %v587
    %592 = vst.msk [vmem:[#allocation2] sm:$0xff] %vm55, %v590
    %593 = vst.msk [vmem:[#allocation2 + $0x8] sm:$0xff] %vm55, %v591
    // Predicated region
    $region22: #{tpu_custom_call.1} parent=1 // pred_check
      %p594 = pneg %p40
    $region23: #{tpu_custom_call.1} parent=1 // pred_check_branch
      %596 = sbr.rel (%p594) target = $region25
    $region24: #{tpu_custom_call.1} parent=1 // pred_region
      %v597 = vld [vmem:[#allocation2] sm:$0xff]
      %v598 = vld [vmem:[#allocation2 + $0x8] sm:$0xff]
      %599 = vst.msk [vmem:[#allocation8] sm:$0xff] %vm55, %v597
      %600 = vst.msk [vmem:[#allocation8 + $0x8] sm:$0xff] %vm55, %v598
    $region25: #{tpu_custom_call.1} parent=1 // pred_fallthru
      _
    // Predicated region
    $region26: #{tpu_custom_call.1} parent=1 // pred_check
      _
    $region27: #{tpu_custom_call.1} parent=1 // pred_check_branch
      %602 = sbr.rel (0) target = $region29
    $region28: #{tpu_custom_call.1} parent=1 // pred_region
      %s604 = ssub.s32 256, 256
      %605 = vsyncadd [#allocation5], %s604
      %s606 = sshll.u32 [#allocation8], 4
      %s607 = int_to_ptr.vmem [resolvable:$true] %s606
      %612 = dma.vmem_to_hbm [thread:$0]  %s607, 256, %s2, [#allocation5], 128, 128, 8
    $region29: #{tpu_custom_call.1} parent=1 // pred_fallthru
      _
    // Predicated region
    $region30: #{tpu_custom_call.1} parent=1 // pred_check
      _
    $region31: #{tpu_custom_call.1} parent=1 // pred_check_branch
      %614 = sbr.rel (0) target = $region33
    $region32: #{tpu_custom_call.1} parent=1 // pred_region
      %615 = dma.done [#allocation5], 256
    $region33: #{tpu_custom_call.1} parent=1 // pred_fallthru
      _
    %616 = vsyncpa [#allocation4], 1
    %617 = vsyncpa [#allocation7], 1
    %618 = vsyncpa [#allocation5], 1

</llo_original>
